<compile_context>
chip_gen: v5e
topology: v5e:2x2
jax: 0.10.0
libtpu: 0.0.40
codegen_flags: <defaults>
</compile_context>

<pallas_src>
import jax
import jax.numpy as jnp
from jax import lax
from jax.experimental import pallas as pl
from jax.experimental.pallas import tpu as pltpu

_LANE = 128


def _device_kind() -> str:
    try:
        return jax.devices()[0].device_kind.lower()
    except Exception:
        return ""


def _pick_layout(n_total: int, itemsize: int):
    """Choose (sublanes, cols) for the lane-dense slab.

    Preference order: (a) native sublane packing for the dtype, (b) exact
    divisibility of n_total (avoids a materialized slice copy of the inputs),
    (c) wide lane-dense columns.
    """
    if itemsize >= 4:
        subs = (8,)
    elif itemsize == 2:
        subs = (16, 8)
    else:
        subs = (32, 16, 8)
    cols_opts = (512, 256, 128)
    for sub in subs:
        for cols in cols_opts:
            unit = sub * cols
            if n_total >= unit and n_total % unit == 0:
                return sub, cols
    sub = subs[0]
    for cols in cols_opts:
        if n_total >= sub * cols:
            return sub, cols
    return 8, _LANE  # too small for a tile anyway; caller uses the plain-JAX path


def reconstruction_loss(y_true: jax.Array, y_pred: jax.Array,
                        *, target_block_bytes: int | None = None) -> jax.Array:
    """MSE(y_true, y_pred) via a Pallas TPU streaming-reduction kernel. Scalar f32."""
    assert y_true.shape == y_pred.shape, "shapes must match (MSELoss, no broadcasting)"

    n_total = y_true.size
    it_t = jnp.dtype(y_true.dtype).itemsize
    it_p = jnp.dtype(y_pred.dtype).itemsize

    sub, cols = _pick_layout(n_total, min(it_t, it_p))
    unit = sub * cols
    groups_total = n_total // unit

    yt_flat = y_true.reshape(-1)
    yp_flat = y_pred.reshape(-1)

    if groups_total == 0:
        # Tiny-input fallback: not enough data for a single (8, 128) tile.
        d = yt_flat.astype(jnp.float32) - yp_flat.astype(jnp.float32)
        return jnp.sum(d * d) / jnp.float32(n_total)

    kind = _device_kind()
    is_v7 = "v7" in kind

    if target_block_bytes is None:
        # ~6 MiB/input on v7x (64 MiB VMEM/TC), ~8 MiB elsewhere (128 MiB physical).
        target_block_bytes = (6 << 20) if is_v7 else (8 << 20)
    max_item = max(it_t, it_p)
    target_block_bytes = int(min(max(target_block_bytes, unit * max_item), 10 << 20))

    # Groups per grid step (per input block).
    tile_groups = max(1, min(groups_total, target_block_bytes // (max_item * unit)))
    # Chunk the in-kernel reduction to keep f32 temporaries ~256 KiB.
    g_chunk = max(1, min(max(1, 65536 // unit), tile_groups))
    tile_groups = (tile_groups // g_chunk) * g_chunk
    n_chunks = tile_groups // g_chunk

    n_tiles = pl.cdiv(groups_total, tile_groups)
    ncores = 2 if (is_v7 and n_tiles >= 2) else 1  # dual-TC split only on v7x-class

    used_groups = groups_total
    used_elems = used_groups * unit

    if used_elems == n_total:
        # Exactly divisible: free bitcast, no HBM copy.
        yt_main = y_true.reshape(used_groups, sub, cols)
        yp_main = y_pred.reshape(used_groups, sub, cols)
    else:
        # Truly ragged size: slice feeding a custom call materializes a copy;
        # the tail left to JAX is < one (sub, cols) group (< 16 KiB).
        yt_main = yt_flat[:used_elems].reshape(used_groups, sub, cols)
        yp_main = yp_flat[:used_elems].reshape(used_groups, sub, cols)

    def run(ncores_: int):
        tiles_per_core = pl.cdiv(n_tiles, ncores_)
        has_partial = (groups_total % tile_groups != 0) or \
                      (ncores_ * tiles_per_core != n_tiles)

        def kernel(yt_ref, yp_ref, out_ref, acc_ref):
            i = pl.program_id(1)

            @pl.when(i == 0)
            def _():
                acc_ref[...] = jnp.zeros_like(acc_ref)

            t = pl.program_id(0) * tiles_per_core + i      # global tile index
            valid = jnp.minimum(groups_total - t * tile_groups, tile_groups)

            def full_chunk(k, acc):
                s = pl.multiple_of(k * g_chunk, g_chunk)
                d = (yt_ref[pl.ds(s, g_chunk)].astype(jnp.float32)
                     - yp_ref[pl.ds(s, g_chunk)].astype(jnp.float32))
                return acc + jnp.sum(d * d, axis=0)

            def accumulate_full():
                acc = lax.fori_loop(0, n_chunks, full_chunk,
                                    jnp.zeros((sub, cols), jnp.float32))
                acc_ref[...] += acc

            if has_partial:
                @pl.when(valid >= tile_groups)       # common case: whole tile valid
                def _():
                    accumulate_full()

                @pl.when(jnp.logical_and(valid > 0, valid < tile_groups))
                def _():                              # edge tile: only valid groups
                    def one_group(g, acc):
                        d = (yt_ref[pl.ds(g, 1)].astype(jnp.float32)
                             - yp_ref[pl.ds(g, 1)].astype(jnp.float32))
                        return acc + jnp.sum(d * d, axis=0)
                    acc = lax.fori_loop(0, valid, one_group,
                                        jnp.zeros((sub, cols), jnp.float32))
                    acc_ref[...] += acc
            else:
                accumulate_full()

            @pl.when(i == tiles_per_core - 1)
            def _():
                # Final cross-lane/sublane reduce in-kernel (XLU is a free slot
                # here); only a (1, 1) scalar per core is written back.
                out_ref[...] = jnp.sum(acc_ref[...], axis=(0, 1), keepdims=True)

        def in_index(c, i):
            # Clamp so overflow steps of the 2-core split stay in-bounds (their
            # contribution is masked to zero in the kernel via `valid <= 0`).
            return (jnp.minimum(c * tiles_per_core + i, n_tiles - 1), 0, 0)

        block_in = (tile_groups, sub, cols)
        block_bytes = tile_groups * unit * (it_t + it_p)          # both inputs, 1 buffer
        vmem_limit = int(min(48 << 20, max(32 << 20, 2 * block_bytes + (8 << 20))))

        sem0 = pltpu.CORE_PARALLEL if ncores_ > 1 else pltpu.ARBITRARY

        return pl.pallas_call(
            kernel,
            out_shape=jax.ShapeDtypeStruct((ncores_, 1, 1), jnp.float32),
            grid_spec=pltpu.PrefetchScalarGridSpec(
                num_scalar_prefetch=0,
                grid=(ncores_, tiles_per_core),
                in_specs=[
                    pl.BlockSpec(block_in, in_index),
                    pl.BlockSpec(block_in, in_index),
                ],
                out_specs=pl.BlockSpec((None, 1, 1), lambda c, i: (c, 0, 0)),
                scratch_shapes=[pltpu.VMEM((sub, cols), jnp.float32)],
            ),
            compiler_params=pltpu.CompilerParams(
                dimension_semantics=(sem0, pltpu.ARBITRARY),
                vmem_limit_bytes=vmem_limit,
            ),
            cost_estimate=pl.CostEstimate(
                flops=3 * used_elems,
                transcendentals=0,
                bytes_accessed=used_elems * (it_t + it_p) + ncores_ * 4,
            ),
        )(yt_main, yp_main)

    try:
        partials = run(ncores)
    except Exception:
        if ncores > 1:
            partials = run(1)   # conservative fallback if core-parallel build fails
        else:
            raise

    sq_sum = jnp.sum(partials)

    # Plain-JAX tail only for the sub-(sub, cols) remainder (< 16 KiB).
    if used_elems < n_total:
        dt = (yt_flat[used_elems:].astype(jnp.float32)
              - yp_flat[used_elems:].astype(jnp.float32))
        sq_sum = sq_sum + jnp.sum(dt * dt)

    return sq_sum / jnp.float32(n_total)


if __name__ == "__main__":
    key = jax.random.PRNGKey(0)
    k1, k2, k3, k4 = jax.random.split(key, 4)

    # Case 1: small aligned load-profile batch (16 profiles of length 128).
    yt = jax.random.normal(k1, (16, 128), dtype=jnp.float32)
    yp = yt + 0.1 * jax.random.normal(k2, (16, 128), dtype=jnp.float32)
    loss = jax.block_until_ready(reconstruction_loss(yt, yp))
    ref = jnp.mean((yt - yp) ** 2)
    assert jnp.allclose(loss, ref, rtol=1e-5, atol=1e-6), (loss, ref)

    # Case 2: ragged shape + tiny block size -> multi-step accumulation + JAX tail.
    yt2 = jax.random.normal(k3, (128, 130), dtype=jnp.float32)
    yp2 = yt2 + 0.05 * jax.random.normal(k4, (128, 130), dtype=jnp.float32)
    loss2 = jax.block_until_ready(
        reconstruction_loss(yt2, yp2, target_block_bytes=16 * 1024))
    ref2 = jnp.mean((yt2 - yp2) ** 2)
    assert jnp.allclose(loss2, ref2, rtol=1e-5, atol=1e-6), (loss2, ref2)

    # Case 3: bf16 inputs (sublane-packed SUB=16; upcast inside the kernel).
    yt3 = yt.astype(jnp.bfloat16)
    yp3 = yp.astype(jnp.bfloat16)
    loss3 = jax.block_until_ready(reconstruction_loss(yt3, yp3))
    ref3 = jnp.mean((yt3.astype(jnp.float32) - yp3.astype(jnp.float32)) ** 2)
    assert jnp.allclose(loss3, ref3, rtol=1e-3, atol=1e-5), (loss3, ref3)

    # Case 4: tiny input -> plain-JAX fallback path.
    yt4 = jax.random.normal(k1, (4, 24), dtype=jnp.float32)
    yp4 = yt4 + 0.2 * jax.random.normal(k2, (4, 24), dtype=jnp.float32)
    loss4 = jax.block_until_ready(reconstruction_loss(yt4, yp4))
    ref4 = jnp.mean((yt4 - yp4) ** 2)
    assert jnp.allclose(loss4, ref4, rtol=1e-5, atol=1e-6), (loss4, ref4)

    # Case 5: exercises the chunked inner loop and the in-kernel partial last tile.
    yt5 = jax.random.normal(k3, (256, 768), dtype=jnp.float32)
    yp5 = yt5 + 0.05 * jax.random.normal(k4, (256, 768), dtype=jnp.float32)
    loss5 = jax.block_until_ready(
        reconstruction_loss(yt5, yp5, target_block_bytes=512 * 1024))
    ref5 = jnp.mean((yt5 - yp5) ** 2)
    assert jnp.allclose(loss5, ref5, rtol=1e-5, atol=1e-6), (loss5, ref5)

    print("KERNEL_OK")
</pallas_src>

<mosaic_0001>
module attributes {stable_mosaic.version = 11 : i64} {
  func.func @kernel(%arg0: i32, %arg1: i32, %arg2: memref<1x8x256xf32, #tpu.memory_space<vmem>>, %arg3: memref<1x8x256xf32, #tpu.memory_space<vmem>>, %arg4: memref<1x1x1xf32, #tpu.memory_space<vmem>>, %arg5: memref<8x256xf32, #tpu.memory_space<vmem>>) attributes {dimension_semantics = [#tpu.dimension_semantics<arbitrary>, #tpu.dimension_semantics<arbitrary>], iteration_bounds = array<i64: 1, 1>, scalar_prefetch = 0 : i64, scratch_operands = 1 : i64, tpu.core_type = #tpu.core_type<tc>, window_params = [{transform_indices = @transform_0, window_bounds = array<i64: 1, 8, 256>}, {transform_indices = @transform_1, window_bounds = array<i64: 1, 8, 256>}, {transform_indices = @transform_2, window_bounds = array<i64: 1, 1, 1>}]} {
    %c0_i32 = arith.constant 0 : i32
    %0 = arith.cmpi eq, %arg1, %c0_i32 : i32
    %1 = arith.extui %0 : i1 to i32
    %c0_i32_0 = arith.constant 0 : i32
    %2 = arith.cmpi ne, %1, %c0_i32_0 : i32
    scf.if %2 {
      %cst_13 = arith.constant 0.000000e+00 : f32
      %20 = vector.broadcast %cst_13 : f32 to vector<8x256xf32>
      %c0_14 = arith.constant 0 : index
      %c0_15 = arith.constant 0 : index
      %21 = vector.load %arg5[%c0_14, %c0_15] : memref<8x256xf32, #tpu.memory_space<vmem>>, vector<8x256xf32>
      tpu.vector_store %arg5[%c0_14, %c0_15], %20 {strides = array<i32>} : memref<8x256xf32, #tpu.memory_space<vmem>>, vector<8x256xf32>,
    } else {
    }
    %cst = arith.constant 0.000000e+00 : f32
    %3 = vector.broadcast %cst : f32 to vector<8x256xf32>
    %c0_i32_1 = arith.constant 0 : i32
    %c1_i32 = arith.constant 1 : i32
    %4 = arith.muli %c0_i32_1, %c1_i32 : i32
    %5 = tpu.assume_multiple %4, 1 : i32
    %6 = arith.index_cast %5 : i32 to index
    %c0 = arith.constant 0 : index
    %c0_2 = arith.constant 0 : index
    %7 = vector.load %arg2[%6, %c0, %c0_2] : memref<1x8x256xf32, #tpu.memory_space<vmem>>, vector<1x8x256xf32>
    %8 = arith.index_cast %5 : i32 to index
    %c0_3 = arith.constant 0 : index
    %c0_4 = arith.constant 0 : index
    %9 = vector.load %arg3[%8, %c0_3, %c0_4] : memref<1x8x256xf32, #tpu.memory_space<vmem>>, vector<1x8x256xf32>
    %10 = arith.subf %7, %9 : vector<1x8x256xf32>
    %11 = arith.mulf %10, %10 : vector<1x8x256xf32>
    %cst_5 = arith.constant dense<0.000000e+00> : vector<8x256xf32>
    %12 = vector.multi_reduction <add>, %11, %cst_5 [0] : vector<1x8x256xf32> to vector<8x256xf32>
    %13 = arith.addf %3, %12 : vector<8x256xf32>
    %c1_i32_6 = arith.constant 1 : i32
    %c0_7 = arith.constant 0 : index
    %c0_8 = arith.constant 0 : index
    %14 = vector.load %arg5[%c0_7, %c0_8] : memref<8x256xf32, #tpu.memory_space<vmem>>, vector<8x256xf32>
    %15 = arith.addf %14, %13 : vector<8x256xf32>
    %c0_9 = arith.constant 0 : index
    %c0_10 = arith.constant 0 : index
    %16 = vector.load %arg5[%c0_9, %c0_10] : memref<8x256xf32, #tpu.memory_space<vmem>>, vector<8x256xf32>
    tpu.vector_store %arg5[%c0_9, %c0_10], %15 {strides = array<i32>} : memref<8x256xf32, #tpu.memory_space<vmem>>, vector<8x256xf32>,
    %c0_i32_11 = arith.constant 0 : i32
    %17 = arith.cmpi eq, %arg1, %c0_i32_11 : i32
    %18 = arith.extui %17 : i1 to i32
    %c0_i32_12 = arith.constant 0 : i32
    %19 = arith.cmpi ne, %18, %c0_i32_12 : i32
    scf.if %19 {
      %c0_13 = arith.constant 0 : index
      %c0_14 = arith.constant 0 : index
      %20 = vector.load %arg5[%c0_13, %c0_14] : memref<8x256xf32, #tpu.memory_space<vmem>>, vector<8x256xf32>
      %21 = vector.shape_cast %20 : vector<8x256xf32> to vector<1x8x256xf32>
      %cst_15 = arith.constant dense<0.000000e+00> : vector<1xf32>
      %22 = vector.multi_reduction <add>, %21, %cst_15 [1, 2] : vector<1x8x256xf32> to vector<1xf32>
      %23 = vector.shape_cast %22 : vector<1xf32> to vector<1x1x1xf32>
      %24 = vector.extract %23[0, 0, 0] : f32 from vector<1x1x1xf32>
      %25 = vector.broadcast %24 : f32 to vector<1x1xf32>
      %c0_16 = arith.constant 0 : index
      %c0_17 = arith.constant 0 : index
      %c0_18 = arith.constant 0 : index
      %26 = vector.load %arg4[%c0_16, %c0_17, %c0_18] : memref<1x1x1xf32, #tpu.memory_space<vmem>>, vector<1x1x1xf32>
      %27 = vector.shape_cast %26 : vector<1x1x1xf32> to vector<1x1xf32>
      %28 = vector.shape_cast %25 : vector<1x1xf32> to vector<1x1x1xf32>
      tpu.vector_store %arg4[%c0_16, %c0_17, %c0_18], %28 {strides = array<i32>} : memref<1x1x1xf32, #tpu.memory_space<vmem>>, vector<1x1x1xf32>,
    } else {
    }
    return
  }
  func.func @transform_0(%arg0: i32, %arg1: i32) -> (i32, i32, i32) {
    %c1_i32 = arith.constant 1 : i32
    %0 = arith.muli %arg0, %c1_i32 : i32
    %1 = arith.addi %0, %arg1 : i32
    %c0_i32 = arith.constant 0 : i32
    %2 = arith.minsi %1, %c0_i32 : i32
    %c0_i32_0 = arith.constant 0 : i32
    %c0_i32_1 = arith.constant 0 : i32
    %c0_i32_2 = arith.constant 0 : i32
    return %2, %c0_i32_0, %c0_i32_1 : i32, i32, i32
  }
  func.func @transform_1(%arg0: i32, %arg1: i32) -> (i32, i32, i32) {
    %c1_i32 = arith.constant 1 : i32
    %0 = arith.muli %arg0, %c1_i32 : i32
    %1 = arith.addi %0, %arg1 : i32
    %c0_i32 = arith.constant 0 : i32
    %2 = arith.minsi %1, %c0_i32 : i32
    %c0_i32_0 = arith.constant 0 : i32
    %c0_i32_1 = arith.constant 0 : i32
    %c0_i32_2 = arith.constant 0 : i32
    return %2, %c0_i32_0, %c0_i32_1 : i32, i32, i32
  }
  func.func @transform_2(%arg0: i32, %arg1: i32) -> (i32, i32, i32) {
    %c0_i32 = arith.constant 0 : i32
    %c0_i32_0 = arith.constant 0 : i32
    %c0_i32_1 = arith.constant 0 : i32
    return %arg0, %c0_i32, %c0_i32_0 : i32, i32, i32
  }
}

</mosaic_0001>

<llo_original>
// kernel: tpu_custom_call.1
$region0: #{tpu_custom_call.1}
  #allocation0 [shape = 'u32[]', space=smem, size = 0x4, offset = 0x4, fixed_abs, tag = 'smem constant byte address 0x4 - core index']
  #allocation1 [shape = 'u32[72,128]{1,0:T(1,128)}', space=vmem, size = 0x9000, scoped, tag = 'internal scratch']
  #allocation2 [shape = 'f32[8,256]{1,0:T(8,128)}', space=vmem, size = 0x2000, scoped, tag = 'scratch operand']
  %s0 = inlined_call_operand.hbm [shape: f32[1,8,256], index: 0, kind: input, shape index: {}]
  %s1 = inlined_call_operand.hbm [shape: f32[1,8,256], index: 1, kind: input, shape index: {}]
  %s2 = inlined_call_operand.hbm [shape: f32[1,1,1], index: 2, kind: output, shape index: {}]
  %s3 = sld [smem:[#allocation0]]
  $region34: #{tpu_custom_call.1} parent=0
    _
  %s5 = ssub.s32 1, %s3
  %s6 = scalar_select 0, %s5, %s3
  $region1: #{tpu_custom_call.1} parent=0
    #allocation3 [shape = 'u8[8192]{0}', space=vmem, size = 0x2000, scoped, tag = 'input window, operand 0, single buffered']
    #allocation4 [shape = 's32[1]{0}', space=sflag, size = 0x4, scoped, tag = 'scoped memory for tpu_custom_call.1']
    #allocation5 [shape = 's32[1]{0}', space=sflag, size = 0x4, scoped, tag = 'scoped memory for tpu_custom_call.1']
    #allocation6 [shape = 'u8[8192]{0}', space=vmem, size = 0x2000, scoped, tag = 'input window, operand 1, single buffered']
    #allocation7 [shape = 's32[1]{0}', space=sflag, size = 0x4, scoped, tag = 'scoped memory for tpu_custom_call.1']
    #allocation8 [shape = 'u8[512]{0}', space=vmem, size = 0x400, scoped, tag = 'output window, operand 0, single buffered']
    %7 = vsyncpa [#allocation4], 0
    %8 = vsyncpa [#allocation7], 0
    %9 = vsyncpa [#allocation5], 0
    // Predicated region
    $region2: #{tpu_custom_call.1} parent=1 // pred_check
      _
    $region3: #{tpu_custom_call.1} parent=1 // pred_check_branch
      %11 = sbr.rel (0) target = $region5
    $region4: #{tpu_custom_call.1} parent=1 // pred_region
      %s12 = sadd.s32 0, 0
      %p13 = scmp.lt.s32.totalorder %s12, 0
      %s14 = scalar_select %p13, %s12, 0
      %16 = vsyncadd [#allocation4], 0
      %s17 = smul.addr %s14, 2
      %s18 = smul.addr %s17, 8
      %s19 = scalar_lea.hbm %s0, %s18
      %s21 = sshll.u32 %s19, 4
      %s22 = int_to_ptr.hbm [resolvable:$true] %s21
      %s23 = sshll.u32 [#allocation3], 4
      %s24 = int_to_ptr.vmem [resolvable:$true] %s23
      %26 = dma.hbm_to_vmem [thread:$0]  %s22, 256, %s24, [#allocation4]
    $region5: #{tpu_custom_call.1} parent=1 // pred_fallthru
      _
    // Predicated region
    $region6: #{tpu_custom_call.1} parent=1 // pred_check
      _
    $region7: #{tpu_custom_call.1} parent=1 // pred_check_branch
      %28 = sbr.rel (0) target = $region9
    $region8: #{tpu_custom_call.1} parent=1 // pred_region
      %s29 = sadd.s32 0, 0
      %p30 = scmp.lt.s32.totalorder %s29, 0
      %s31 = scalar_select %p30, %s29, 0
      %33 = vsyncadd [#allocation7], 0
      %s34 = smul.addr %s31, 2
      %s35 = smul.addr %s34, 8
      %s36 = scalar_lea.hbm %s1, %s35
      %s38 = sshll.u32 %s36, 4
      %s39 = int_to_ptr.hbm [resolvable:$true] %s38
      %s40 = sshll.u32 [#allocation6], 4
      %s41 = int_to_ptr.vmem [resolvable:$true] %s40
      %43 = dma.hbm_to_vmem [thread:$0]  %s39, 256, %s41, [#allocation7]
    $region9: #{tpu_custom_call.1} parent=1 // pred_fallthru
      _
    // Predicated region
    $region10: #{tpu_custom_call.1} parent=1 // pred_check
      _
    $region11: #{tpu_custom_call.1} parent=1 // pred_check_branch
      %45 = sbr.rel (0) target = $region13
    $region12: #{tpu_custom_call.1} parent=1 // pred_region
      %47 = dma.done [#allocation4], 256
    $region13: #{tpu_custom_call.1} parent=1 // pred_fallthru
      _
    // Predicated region
    $region14: #{tpu_custom_call.1} parent=1 // pred_check
      _
    $region15: #{tpu_custom_call.1} parent=1 // pred_check_branch
      %49 = sbr.rel (0) target = $region17
    $region16: #{tpu_custom_call.1} parent=1 // pred_region
      %51 = dma.done [#allocation7], 256
    $region17: #{tpu_custom_call.1} parent=1 // pred_fallthru
      _
    %s52 = sadd.s32 0, 0
    %p53 = scmp.lt.s32.totalorder %s52, 0
    %s54 = scalar_select %p53, %s52, 0
    %s55 = sadd.s32 0, 0
    %p56 = scmp.lt.s32.totalorder %s55, 0
    %s57 = scalar_select %p56, %s55, 0
    %p58 = scmp.eq.s32.totalorder 0, 0
    // Predicated region
    $region18: #{tpu_custom_call.1} parent=1 // pred_check
      %p59 = pneg %p58
    $region19: #{tpu_custom_call.1} parent=1 // pred_check_branch
      %61 = sbr.rel (%p59) target = $region21
    $region20: #{tpu_custom_call.1} parent=1 // pred_region
      %62 = vst [vmem:[#allocation2] sm:$0xff] 0.0
      %63 = vst [vmem:[#allocation2 + $0x8] sm:$0xff] 0.0
    $region21: #{tpu_custom_call.1} parent=1 // pred_fallthru
      _
    %s64 = smul.u32 0, 2
    %s65 = smul.addr %s64, 8
    %s66 = scalar_lea.vmem [#allocation3], %s65
    %v67 = vld [vmem:[%s66] sm:$0xff]
    %v68 = vld [vmem:[%s66 + $0x8] sm:$0xff]
    %s69 = smul.addr %s64, 8
    %s70 = scalar_lea.vmem [#allocation6], %s69
    %v71 = vld [vmem:[%s70] sm:$0xff]
    %v72 = vld [vmem:[%s70 + $0x8] sm:$0xff]
    %v73 = vsub.f32 %v67, %v71
    %v74 = vsub.f32 %v68, %v72
    %v75 = vmul.f32 %v73, %v73
    %v76 = vmul.f32 %v74, %v74
    %v77 = vadd.f32 %v75, 0.0
    %v78 = vadd.f32 %v76, 0.0
    %v79 = vadd.f32 %v77, 0.0
    %v80 = vadd.f32 %v78, 0.0
    %v81 = vld [vmem:[#allocation2] sm:$0xff]
    %v82 = vld [vmem:[#allocation2 + $0x8] sm:$0xff]
    %v83 = vadd.f32 %v81, %v79
    %v84 = vadd.f32 %v82, %v80
    %85 = vst [vmem:[#allocation2] sm:$0xff] %v83
    %86 = vst [vmem:[#allocation2 + $0x8] sm:$0xff] %v84
    // Predicated region
    $region22: #{tpu_custom_call.1} parent=1 // pred_check
      %p87 = pneg %p58
    $region23: #{tpu_custom_call.1} parent=1 // pred_check_branch
      %89 = sbr.rel (%p87) target = $region25
    $region24: #{tpu_custom_call.1} parent=1 // pred_region
      %v90 = vld [vmem:[#allocation2] sm:$0xff]
      %v91 = vld [vmem:[#allocation2 + $0x8] sm:$0xff]
      %v92 = vadd.f32 %v90, %v91
      %93 = vadd.xlane.f32.xlu0 %v92
      %v94 = vpop.xlane.xlu0 %93
      %v95 = vrot.slane %v94, 4
      %v96 = vadd.f32 %v94, %v95
      %v97 = vrot.slane %v96, 2
      %v98 = vadd.f32 %v96, %v97
      %v99 = vrot.slane %v98, 1
      %v100 = vadd.f32 %v98, %v99
      %s101 = vtos %v100
      %v102 = vstv %s101
      %vm103 = vcmask 0
      %104 = vst.msk [vmem:[#allocation8] sm:$0x1] %vm103, %v102
    $region25: #{tpu_custom_call.1} parent=1 // pred_fallthru
      _
    // Predicated region
    $region26: #{tpu_custom_call.1} parent=1 // pred_check
      _
    $region27: #{tpu_custom_call.1} parent=1 // pred_check_branch
      %106 = sbr.rel (0) target = $region29
    $region28: #{tpu_custom_call.1} parent=1 // pred_region
      %108 = vsyncadd [#allocation5], 0
      %s110 = sshll.u32 [#allocation8], 4
      %s111 = int_to_ptr.vmem [resolvable:$true] %s110
      %s112 = sshll.u32 %s2, 4
      %s113 = int_to_ptr.hbm [resolvable:$true] %s112
      %115 = dma.vmem_to_hbm [thread:$0]  %s111, 16, %s113, [#allocation5]
    $region29: #{tpu_custom_call.1} parent=1 // pred_fallthru
      _
    // Predicated region
    $region30: #{tpu_custom_call.1} parent=1 // pred_check
      _
    $region31: #{tpu_custom_call.1} parent=1 // pred_check_branch
      %117 = sbr.rel (0) target = $region33
    $region32: #{tpu_custom_call.1} parent=1 // pred_region
      %119 = dma.done [#allocation5], 16
    $region33: #{tpu_custom_call.1} parent=1 // pred_fallthru
      _
    %120 = vsyncpa [#allocation4], 1
    %121 = vsyncpa [#allocation7], 1
    %122 = vsyncpa [#allocation5], 1

</llo_original>
